<compile_context>
chip_gen: v5e
topology: v5e:2x2
jax: 0.10.0
libtpu: 0.0.40
codegen_flags: <defaults>
</compile_context>

<pallas_src>
import functools

import jax
import jax.numpy as jnp
from jax import lax
from jax.experimental import pallas as pl
from jax.experimental.pallas import tpu as pltpu

EPS = 1e-12  # F.normalize default eps


def _round_up(a: int, b: int) -> int:
    return ((a + b - 1) // b) * b


def _normlinear_kernel(x_ref, w_ref, invw_ref, o_ref, acc_ref, xsq_ref):
    k = pl.program_id(2)

    @pl.when(k == 0)
    def _init():
        acc_ref[...] = jnp.zeros_like(acc_ref)
        xsq_ref[...] = jnp.zeros_like(xsq_ref)

    x = x_ref[...]                      # (tm, tk)
    w = w_ref[...]                      # (tn, tk)

    # MXU: contract the embed (K) axis of this tile pair, accumulate in f32.
    acc_ref[...] += lax.dot_general(
        x, w,
        dimension_numbers=(((1,), (1,)), ((), ())),
        preferred_element_type=jnp.float32,
    )

    # Accumulate the x row sum-of-squares for this K slab (O(tm*tk) VPU/XLU,
    # negligible next to the O(tm*tn*tk) matmul).
    xf = x.astype(jnp.float32)
    xsq_ref[...] += jnp.sum(xf * xf, axis=1, keepdims=True)      # (tm, 1)

    @pl.when(k == pl.num_programs(2) - 1)
    def _finalize():
        # Exact PyTorch semantics: 1 / max(||x_row||, eps), on a (tm, 1)
        # vector only (cheap; avoids any subnormal eps**2 issues).
        inv_x = 1.0 / jnp.maximum(jnp.sqrt(xsq_ref[...]), EPS)   # (tm, 1)
        out = acc_ref[...] * inv_x * invw_ref[...]               # (tm, tn)
        o_ref[...] = out.astype(o_ref.dtype)


@functools.partial(jax.jit, static_argnames=("tm", "tn", "tk"))
def norm_layer_forward(x, weight, *, tm=256, tn=512, tk=512):
    """x: (B, D), weight: (C, D) -> (B, C); cosine-similarity linear."""
    B, D = x.shape
    C, Dw = weight.shape
    assert D == Dw, "embed_dim mismatch"

    # Clamp tiles to the hardware-aligned problem size, then zero-pad so every
    # block is full.  Zero padding is safe: it contributes 0 to both the dot
    # products and the sum-of-squares, and padded rows/cols are sliced off.
    tm = min(tm, _round_up(B, 8))
    tn = min(tn, _round_up(C, 128))
    tk = min(tk, _round_up(D, 128))
    Bp, Cp, Dp = _round_up(B, tm), _round_up(C, tn), _round_up(D, tk)

    xp = jnp.pad(x, ((0, Bp - B), (0, Dp - D))) if (Bp, Dp) != (B, D) else x
    wp = (jnp.pad(weight, ((0, Cp - C), (0, Dp - D)))
          if (Cp, Dp) != (C, D) else weight)

    # Hoisted once (O(C*D)): inverse L2 norms of the weight rows, fed to the
    # kernel as a tiny (1, Cp) vector so W is never re-reduced per batch tile.
    # Padded rows get inv_w = 1/eps, harmless: their accumulated dot is
    # exactly 0 and those columns are discarded below.
    wsq = jnp.sum(wp.astype(jnp.float32) ** 2, axis=1)
    inv_w = (1.0 / jnp.maximum(jnp.sqrt(wsq), EPS))[None, :]     # (1, Cp)

    grid = (Bp // tm, Cp // tn, Dp // tk)

    out = pl.pallas_call(
        _normlinear_kernel,
        out_shape=jax.ShapeDtypeStruct((Bp, Cp), x.dtype),
        grid=grid,
        in_specs=[
            pl.BlockSpec((tm, tk), lambda i, j, k: (i, k)),   # x tile
            pl.BlockSpec((tn, tk), lambda i, j, k: (j, k)),   # W tile
            pl.BlockSpec((1, tn), lambda i, j, k: (0, j)),    # inv_w slice
        ],
        out_specs=pl.BlockSpec((tm, tn), lambda i, j, k: (i, j)),
        scratch_shapes=[
            pltpu.VMEM((tm, tn), jnp.float32),   # f32 matmul accumulator
            pltpu.VMEM((tm, 1), jnp.float32),    # x row sum-of-squares
        ],
        compiler_params=pltpu.CompilerParams(
            dimension_semantics=("parallel", "parallel", "arbitrary"),
        ),
    )(xp, wp, inv_w)

    return out[:B, :C]


def norm_layer_reference(x, weight):
    xn = x / jnp.maximum(jnp.linalg.norm(x, axis=1, keepdims=True), EPS)
    wn = weight / jnp.maximum(jnp.linalg.norm(weight, axis=1, keepdims=True), EPS)
    return xn @ wn.T


if __name__ == "__main__":
    key = jax.random.PRNGKey(0)
    k_x, k_w = jax.random.split(key)

    batch = 8
    embed_dim = 32
    n_classes = 16

    # Deterministic parameter init mimicking nn.Parameter uniform_(-stdv, stdv)
    stdv = 1.0 / jnp.sqrt(jnp.float32(embed_dim))
    weight = jax.random.uniform(
        k_w, (n_classes, embed_dim), dtype=jnp.float32,
        minval=-stdv, maxval=stdv)

    x = jax.random.normal(k_x, (batch, embed_dim), dtype=jnp.float32)

    out = norm_layer_forward(x, weight)
    out = jax.block_until_ready(out)

    ref = norm_layer_reference(x, weight)
    assert out.shape == (batch, n_classes)
    assert jnp.allclose(out, ref, atol=1e-5, rtol=1e-5), (
        f"max abs err {jnp.max(jnp.abs(out - ref))}")

    print("KERNEL_OK")
</pallas_src>

<mosaic_0001>
module attributes {stable_mosaic.version = 11 : i64} {
  func.func @_normlinear_kernel(%arg0: i32, %arg1: i32, %arg2: i32, %arg3: memref<8x128xf32, #tpu.memory_space<vmem>>, %arg4: memref<128x128xf32, #tpu.memory_space<vmem>>, %arg5: memref<1x128xf32, #tpu.memory_space<vmem>>, %arg6: memref<8x128xf32, #tpu.memory_space<vmem>>, %arg7: memref<8x128xf32, #tpu.memory_space<vmem>>, %arg8: memref<8x1xf32, #tpu.memory_space<vmem>>) attributes {dimension_semantics = [#tpu.dimension_semantics<parallel>, #tpu.dimension_semantics<parallel>, #tpu.dimension_semantics<arbitrary>], iteration_bounds = array<i64: 1, 1, 1>, scalar_prefetch = 0 : i64, scratch_operands = 2 : i64, tpu.core_type = #tpu.core_type<tc>, window_params = [{transform_indices = @transform_0, window_bounds = array<i64: 8, 128>}, {transform_indices = @transform_1, window_bounds = array<i64: 128, 128>}, {transform_indices = @transform_2, window_bounds = array<i64: 1, 128>}, {transform_indices = @transform_3, window_bounds = array<i64: 8, 128>}]} {
    %c0_i32 = arith.constant 0 : i32
    %0 = arith.cmpi eq, %arg2, %c0_i32 : i32
    %1 = arith.extui %0 : i1 to i32
    %c0_i32_0 = arith.constant 0 : i32
    %2 = arith.cmpi ne, %1, %c0_i32_0 : i32
    scf.if %2 {
      %cst_15 = arith.constant 0.000000e+00 : f32
      %18 = vector.broadcast %cst_15 : f32 to vector<8x128xf32>
      %c0_16 = arith.constant 0 : index
      %c0_17 = arith.constant 0 : index
      %19 = vector.load %arg7[%c0_16, %c0_17] : memref<8x128xf32, #tpu.memory_space<vmem>>, vector<8x128xf32>
      tpu.vector_store %arg7[%c0_16, %c0_17], %18 {strides = array<i32>} : memref<8x128xf32, #tpu.memory_space<vmem>>, vector<8x128xf32>,
      %cst_18 = arith.constant 0.000000e+00 : f32
      %20 = vector.broadcast %cst_18 : f32 to vector<8x1xf32>
      %c0_19 = arith.constant 0 : index
      %c0_20 = arith.constant 0 : index
      %21 = vector.load %arg8[%c0_19, %c0_20] : memref<8x1xf32, #tpu.memory_space<vmem>>, vector<8x1xf32>
      tpu.vector_store %arg8[%c0_19, %c0_20], %20 {strides = array<i32>} : memref<8x1xf32, #tpu.memory_space<vmem>>, vector<8x1xf32>,
    } else {
    }
    %c0 = arith.constant 0 : index
    %c0_1 = arith.constant 0 : index
    %3 = vector.load %arg3[%c0, %c0_1] : memref<8x128xf32, #tpu.memory_space<vmem>>, vector<8x128xf32>
    %c0_2 = arith.constant 0 : index
    %c0_3 = arith.constant 0 : index
    %4 = vector.load %arg4[%c0_2, %c0_3] : memref<128x128xf32, #tpu.memory_space<vmem>>, vector<128x128xf32>
    %c0_4 = arith.constant 0 : index
    %c0_5 = arith.constant 0 : index
    %5 = vector.load %arg7[%c0_4, %c0_5] : memref<8x128xf32, #tpu.memory_space<vmem>>, vector<8x128xf32>
    %cst = arith.constant dense<0.000000e+00> : vector<8x128xf32>
    %6 = tpu.matmul %3, %4, %cst {dimension_numbers = #tpu.dot_dimension_numbers<[1], [1], [0], [0], [0, 0, 1, 0], [], []>} : vector<8x128xf32>, vector<128x128xf32>, vector<8x128xf32> -> vector<8x128xf32>
    %7 = arith.addf %5, %6 : vector<8x128xf32>
    %c0_6 = arith.constant 0 : index
    %c0_7 = arith.constant 0 : index
    %8 = vector.load %arg7[%c0_6, %c0_7] : memref<8x128xf32, #tpu.memory_space<vmem>>, vector<8x128xf32>
    tpu.vector_store %arg7[%c0_6, %c0_7], %7 {strides = array<i32>} : memref<8x128xf32, #tpu.memory_space<vmem>>, vector<8x128xf32>,
    %c0_8 = arith.constant 0 : index
    %c0_9 = arith.constant 0 : index
    %9 = vector.load %arg8[%c0_8, %c0_9] : memref<8x1xf32, #tpu.memory_space<vmem>>, vector<8x1xf32>
    %10 = arith.mulf %3, %3 : vector<8x128xf32>
    %cst_10 = arith.constant dense<0.000000e+00> : vector<8xf32>
    %11 = vector.multi_reduction <add>, %10, %cst_10 [1] : vector<8x128xf32> to vector<8xf32>
    %12 = vector.shape_cast %11 : vector<8xf32> to vector<8x1xf32>
    %13 = arith.addf %9, %12 : vector<8x1xf32>
    %c0_11 = arith.constant 0 : index
    %c0_12 = arith.constant 0 : index
    %14 = vector.load %arg8[%c0_11, %c0_12] : memref<8x1xf32, #tpu.memory_space<vmem>>, vector<8x1xf32>
    tpu.vector_store %arg8[%c0_11, %c0_12], %13 {strides = array<i32>} : memref<8x1xf32, #tpu.memory_space<vmem>>, vector<8x1xf32>,
    %c0_i32_13 = arith.constant 0 : i32
    %15 = arith.cmpi eq, %arg2, %c0_i32_13 : i32
    %16 = arith.extui %15 : i1 to i32
    %c0_i32_14 = arith.constant 0 : i32
    %17 = arith.cmpi ne, %16, %c0_i32_14 : i32
    scf.if %17 {
      %c0_15 = arith.constant 0 : index
      %c0_16 = arith.constant 0 : index
      %18 = vector.load %arg8[%c0_15, %c0_16] : memref<8x1xf32, #tpu.memory_space<vmem>>, vector<8x1xf32>
      %19 = math.sqrt %18 : vector<8x1xf32>
      %cst_17 = arith.constant 9.99999996E-13 : f32
      %20 = vector.broadcast %cst_17 : f32 to vector<8x1xf32>
      %21 = arith.maximumf %19, %20 : vector<8x1xf32>
      %cst_18 = arith.constant 1.000000e+00 : f32
      %22 = vector.broadcast %cst_18 : f32 to vector<8x1xf32>
      %23 = arith.divf %22, %21 : vector<8x1xf32>
      %c0_19 = arith.constant 0 : index
      %c0_20 = arith.constant 0 : index
      %24 = vector.load %arg7[%c0_19, %c0_20] : memref<8x128xf32, #tpu.memory_space<vmem>>, vector<8x128xf32>
      %25 = vector.broadcast %23 : vector<8x1xf32> to vector<8x128xf32>
      %26 = arith.mulf %24, %25 : vector<8x128xf32>
      %c0_21 = arith.constant 0 : index
      %c0_22 = arith.constant 0 : index
      %27 = vector.load %arg5[%c0_21, %c0_22] : memref<1x128xf32, #tpu.memory_space<vmem>>, vector<1x128xf32>
      %28 = vector.broadcast %27 : vector<1x128xf32> to vector<8x128xf32>
      %29 = arith.mulf %26, %28 : vector<8x128xf32>
      %c0_23 = arith.constant 0 : index
      %c0_24 = arith.constant 0 : index
      %30 = vector.load %arg6[%c0_23, %c0_24] : memref<8x128xf32, #tpu.memory_space<vmem>>, vector<8x128xf32>
      tpu.vector_store %arg6[%c0_23, %c0_24], %29 {strides = array<i32>} : memref<8x128xf32, #tpu.memory_space<vmem>>, vector<8x128xf32>,
    } else {
    }
    return
  }
  func.func @transform_0(%arg0: i32, %arg1: i32, %arg2: i32) -> (i32, i32) {
    %c0_i32 = arith.constant 0 : i32
    return %arg0, %arg2 : i32, i32
  }
  func.func @transform_1(%arg0: i32, %arg1: i32, %arg2: i32) -> (i32, i32) {
    %c0_i32 = arith.constant 0 : i32
    return %arg1, %arg2 : i32, i32
  }
  func.func @transform_2(%arg0: i32, %arg1: i32, %arg2: i32) -> (i32, i32) {
    %c0_i32 = arith.constant 0 : i32
    %c0_i32_0 = arith.constant 0 : i32
    return %c0_i32, %arg1 : i32, i32
  }
  func.func @transform_3(%arg0: i32, %arg1: i32, %arg2: i32) -> (i32, i32) {
    %c0_i32 = arith.constant 0 : i32
    return %arg0, %arg1 : i32, i32
  }
}

</mosaic_0001>

<llo_original>
// kernel: norm_layer_forward.1
$region0: #{norm_layer_forward.1}
  #allocation0 [shape = 'u32[]', space=smem, size = 0x4, offset = 0x4, fixed_abs, tag = 'smem constant byte address 0x4 - core index']
  #allocation1 [shape = 'u32[72,128]{1,0:T(1,128)}', space=vmem, size = 0x9000, scoped, tag = 'internal scratch']
  #allocation2 [shape = 'f32[8,128]{1,0:T(8,128)}', space=vmem, size = 0x1000, scoped, tag = 'scratch operand']
  #allocation3 [shape = 'f32[8,1]{1,0:T(8,128)}', space=vmem, size = 0x1000, scoped, tag = 'scratch operand']
  %s0 = inlined_call_operand.vmem [shape: f32[8,128], index: 0, kind: input, shape index: {}]
  %s1 = inlined_call_operand.vmem [shape: f32[128,128], index: 1, kind: input, shape index: {}]
  %s2 = inlined_call_operand.vmem [shape: f32[1,128], index: 2, kind: input, shape index: {}]
  %s3 = inlined_call_operand.hbm [shape: f32[8,128], index: 3, kind: output, shape index: {}]
  %s4 = sld [smem:[#allocation0]]
  $region30: #{norm_layer_forward.1} parent=0
    _
  %s6 = ssub.s32 1, %s4
  %s7 = scalar_select 0, %s6, %s4
  $region1: #{norm_layer_forward.1} parent=0
    #allocation4 [shape = 'u8[4096]{0}', space=vmem, size = 0x1000, scoped, tag = 'output window, operand 0, single buffered']
    #allocation5 [shape = 's32[1]{0}', space=sflag, size = 0x4, scoped, tag = 'scoped memory for norm_layer_forward.1']
    %8 = vsyncpa [#allocation5], 0
    // Predicated region
    $region2: #{norm_layer_forward.1} parent=1 // pred_check
      _
    $region3: #{norm_layer_forward.1} parent=1 // pred_check_branch
      %10 = sbr.rel (0) target = $region5
    $region4: #{norm_layer_forward.1} parent=1 // pred_region
      _
    $region5: #{norm_layer_forward.1} parent=1 // pred_fallthru
      _
    // Predicated region
    $region6: #{norm_layer_forward.1} parent=1 // pred_check
      _
    $region7: #{norm_layer_forward.1} parent=1 // pred_check_branch
      %12 = sbr.rel (0) target = $region9
    $region8: #{norm_layer_forward.1} parent=1 // pred_region
      _
    $region9: #{norm_layer_forward.1} parent=1 // pred_fallthru
      _
    // Predicated region
    $region10: #{norm_layer_forward.1} parent=1 // pred_check
      _
    $region11: #{norm_layer_forward.1} parent=1 // pred_check_branch
      %14 = sbr.rel (0) target = $region13
    $region12: #{norm_layer_forward.1} parent=1 // pred_region
      _
    $region13: #{norm_layer_forward.1} parent=1 // pred_fallthru
      _
    %p15 = scmp.eq.s32.totalorder 0, 0
    // Predicated region
    $region14: #{norm_layer_forward.1} parent=1 // pred_check
      %p16 = pneg %p15
    $region15: #{norm_layer_forward.1} parent=1 // pred_check_branch
      %18 = sbr.rel (%p16) target = $region17
    $region16: #{norm_layer_forward.1} parent=1 // pred_region
      %19 = vst [vmem:[#allocation2] sm:$0xff] 0.0
      %vm20 = vcmask 7168
      %21 = vst.msk [vmem:[#allocation3] sm:$0xff] %vm20, 0.0
    $region17: #{norm_layer_forward.1} parent=1 // pred_fallthru
      _
    %v22 = vld [vmem:[%s0] sm:$0xff]
    %v23 = vld [vmem:[%s1] sm:$0xff]
    %v24 = vld [vmem:[%s1 + $0x8] sm:$0xff]
    %v25 = vld [vmem:[%s1 + $0x10] sm:$0xff]
    %v26 = vld [vmem:[%s1 + $0x18] sm:$0xff]
    %v27 = vld [vmem:[%s1 + $0x20] sm:$0xff]
    %v28 = vld [vmem:[%s1 + $0x28] sm:$0xff]
    %v29 = vld [vmem:[%s1 + $0x30] sm:$0xff]
    %v30 = vld [vmem:[%s1 + $0x38] sm:$0xff]
    %v31 = vld [vmem:[%s1 + $0x40] sm:$0xff]
    %v32 = vld [vmem:[%s1 + $0x48] sm:$0xff]
    %v33 = vld [vmem:[%s1 + $0x50] sm:$0xff]
    %v34 = vld [vmem:[%s1 + $0x58] sm:$0xff]
    %v35 = vld [vmem:[%s1 + $0x60] sm:$0xff]
    %v36 = vld [vmem:[%s1 + $0x68] sm:$0xff]
    %v37 = vld [vmem:[%s1 + $0x70] sm:$0xff]
    %v38 = vld [vmem:[%s1 + $0x78] sm:$0xff]
    %v39 = vld [vmem:[#allocation2] sm:$0xff]
    %40 = vmatpush.xpose.msra.mxu0 %v38
    %41 = vmatpush.xpose.msra.mxu0 %v37
    %42 = vmatpush.xpose.msra.mxu0 %v36
    %43 = vmatpush.xpose.msra.mxu0 %v35
    %44 = vmatpush.xpose.msra.mxu0 %v34
    %45 = vmatpush.xpose.msra.mxu0 %v33
    %46 = vmatpush.xpose.msra.mxu0 %v32
    %47 = vmatpush.xpose.msra.mxu0 %v31
    %48 = vmatpush.xpose.msra.mxu0 %v30
    %49 = vmatpush.xpose.msra.mxu0 %v29
    %50 = vmatpush.xpose.msra.mxu0 %v28
    %51 = vmatpush.xpose.msra.mxu0 %v27
    %52 = vmatpush.xpose.msra.mxu0 %v26
    %53 = vmatpush.xpose.msra.mxu0 %v25
    %54 = vmatpush.xpose.msra.mxu0 %v24
    %55 = vmatpush.xpose.msra.mxu0 %v23
    %56 = vmatmul.f32.gmra.mxu0 %v22
    %v57 = vpop.f32.mrf.mxu0
    %v58 = vadd.f32 0.0, %v57
    %59 = vdwg.mxu0
    %v60 = vadd.f32 %v39, %v58
    %61 = vst [vmem:[#allocation2] sm:$0xff] %v60
    %v62 = vld [vmem:[#allocation3] sm:$0xff]
    %v63 = vmul.f32 %v22, %v22
    %64 = vadd.xlane.f32.xlu0 %v63
    %v65 = vpop.xlane.xlu0 %64
    %v66 = vadd.f32 %v62, %v65
    %vm67 = vcmask 7168
    %68 = vst.msk [vmem:[#allocation3] sm:$0xff] %vm67, %v66
    // Predicated region
    $region18: #{norm_layer_forward.1} parent=1 // pred_check
      %p69 = pneg %p15
    $region19: #{norm_layer_forward.1} parent=1 // pred_check_branch
      %71 = sbr.rel (%p69) target = $region21
    $region20: #{norm_layer_forward.1} parent=1 // pred_region
      %v72 = vld [vmem:[#allocation3] sm:$0xff]
      %v73 = vrsqrt.pop %v72
      %v74 = vmul.f32 %v73, %v72
      %v75 = vmul.f32 %v74, %v73
      %v76 = vmul.f32 0.5, %v75
      %v77 = vsub.f32 1.5, %v76
      %v78 = vmul.f32 %v73, %v77
      %v79 = vmul.f32 %v72, %v78
      %vm80 = vcmp.eq.f32.partialorder %v72, inf
      %v81 = vsel %vm80, %v72, %v79
      %vm82 = vcmp.eq.f32.partialorder %v72, 0.0
      %v83 = vand.u32 %v72, 2147483648
      %v84 = vsel %vm82, %v83, %v81
      %v85 = vmax.f32 %v84, 1e-12
      %v86 = vrcp.pop %v85
      %v87 = vmul.f32 %v85, %v86
      %v88 = vsub.f32 1.0, %v87
      %v89 = vmul.f32 %v86, %v88
      %v90 = vadd.f32 %v86, %v89
      %vm91 = vweird.f32 %v85
      %vm92 = vweird.f32 %v86
      %vm93 = vmor %vm91, %vm92
      %v94 = vsel %vm93, %v86, %v90
      %v95 = vand.u32 2147483647, %v85
      %vm96 = vcmp.eq.f32.partialorder %v95, 8.507059e+37
      %v97 = vand.u32 %v85, 2147483648
      %v98 = vor.u32 1.1754944e-38, %v97
      %v99 = vsel %vm96, %v98, %v94
      %v100 = vmul.f32 1.0, %v99
      %v101 = vld [vmem:[#allocation2] sm:$0xff]
      %103 = vset.pattern.permute.xlu0 0
      %104 = vperm.xlu0 %103, %v100
      %v105 = vpop.permute.xlu0 %104
      %v107 = vmul.f32 %v101, %v105
      %v108 = vld [vmem:[%s2] sm:$0x1]
      %v110 = vperm.slane %v108, 0
      %v112 = vmul.f32 %v107, %v110
      %113 = vst [vmem:[#allocation4] sm:$0xff] %v112
    $region21: #{norm_layer_forward.1} parent=1 // pred_fallthru
      _
    // Predicated region
    $region22: #{norm_layer_forward.1} parent=1 // pred_check
      _
    $region23: #{norm_layer_forward.1} parent=1 // pred_check_branch
      %115 = sbr.rel (0) target = $region25
    $region24: #{norm_layer_forward.1} parent=1 // pred_region
      %117 = vsyncadd [#allocation5], 0
      %s119 = sshll.u32 [#allocation4], 4
      %s120 = int_to_ptr.vmem [resolvable:$true] %s119
      %s121 = sshll.u32 %s3, 4
      %s122 = int_to_ptr.hbm [resolvable:$true] %s121
      %124 = dma.vmem_to_hbm [thread:$0]  %s120, 128, %s122, [#allocation5]
    $region25: #{norm_layer_forward.1} parent=1 // pred_fallthru
      _
    // Predicated region
    $region26: #{norm_layer_forward.1} parent=1 // pred_check
      _
    $region27: #{norm_layer_forward.1} parent=1 // pred_check_branch
      %126 = sbr.rel (0) target = $region29
    $region28: #{norm_layer_forward.1} parent=1 // pred_region
      %128 = dma.done [#allocation5], 128
    $region29: #{norm_layer_forward.1} parent=1 // pred_fallthru
      _
    %129 = vsyncpa [#allocation5], 1

</llo_original>
